<compile_context>
chip_gen: v7x
topology: tpu7x:2x2x1
jax: 0.10.0
libtpu: 0.0.40
codegen_flags: <defaults>
</compile_context>

<pallas_src>
import functools

import jax
import jax.numpy as jnp
from jax.experimental import pallas as pl
from jax.experimental.pallas import tpu as pltpu


def _sublane(dtype) -> int:
    """Minimum sublane multiple for dense tiles of this dtype."""
    return {4: 8, 2: 16, 1: 32}.get(jnp.dtype(dtype).itemsize, 8)


def _default_target_bytes() -> int:
    """Per-buffer tile budget.  Total VMEM footprint ~= 6x this value
    (3 arrays x 2 pipeline buffers), so keep 6*target under the default
    scoped VMEM: 16 MiB on v5e/older -> 2 MiB/buffer; 32 MiB on v6e/v7x
    -> 4 MiB/buffer."""
    try:
        kind = jax.devices()[0].device_kind.lower()
    except Exception:  # pragma: no cover - defensive, e.g. no devices yet
        kind = ""
    if ("v6" in kind) or ("v7" in kind):
        return 4 << 20
    return 2 << 20


def _pick_tiles(B, T, D, itemsize, sublane, target_bytes):
    """Choose (tile_b, tile_t) so that:
       * tile_t divides T and is a multiple of `sublane`,
       * tile_b divides B,
       * one (tile_b, tile_t, D) buffer is <= target_bytes,
    preferring the largest tiles (fewest grid steps / biggest DMAs)."""
    row_bytes = D * itemsize
    row_budget = max(sublane, target_bytes // row_bytes)

    if T <= row_budget:
        # Whole head fits in one buffer: block over batch to amortize the
        # per-grid-step overhead instead of issuing many tiny DMAs.
        tile_b = 1
        for cand in range(1, B + 1):
            if B % cand == 0 and cand * T <= row_budget:
                tile_b = cand
        return tile_b, T

    # Largest sublane-aligned divisor of T within the row budget.
    best = sublane
    rows = sublane
    while rows <= row_budget:
        if T % rows == 0:
            best = rows
        rows += sublane
    return 1, best


def _f_block_head_kernel(img_ref, txt_ref, out_ref):
    # img_ref / txt_ref / out_ref: (tile_b, tile_t, D) VMEM tiles of the head.
    txt = txt_ref[...]
    out_ref[...] = (img_ref[...] * txt + txt).astype(out_ref.dtype)


def _f_block_pallas(image_init, text_image_init, tile_b, tile_t):
    B, T, D = image_init.shape
    S = text_image_init.shape[1]            # == num_tokens + max_length here
    itemsize = jnp.dtype(text_image_init.dtype).itemsize

    grid = (B // tile_b, T // tile_t)       # covers ONLY head rows [0, T)
    head_idx_map = lambda b, s: (b, s, 0)   # shared by text input AND output

    return pl.pallas_call(
        _f_block_head_kernel,
        out_shape=jax.ShapeDtypeStruct((B, S, D), text_image_init.dtype),
        grid=grid,
        in_specs=[
            pl.BlockSpec((tile_b, tile_t, D), head_idx_map),   # image head
            pl.BlockSpec((tile_b, tile_t, D), head_idx_map),   # text head
        ],
        # Output spec MUST match the text input spec: rows [T, S) are never
        # visited, so the aliased tail bytes pass through untouched.
        out_specs=pl.BlockSpec((tile_b, tile_t, D), head_idx_map),
        input_output_aliases={1: 0},        # text_image_init  <->  output
        compiler_params=pltpu.CompilerParams(
            dimension_semantics=("parallel", "parallel"),
        ),
        cost_estimate=pl.CostEstimate(
            flops=2 * B * T * D,            # one mul + one add per head elem
            transcendentals=0,
            bytes_accessed=3 * B * T * D * itemsize,
        ),
    )(image_init, text_image_init)


def f_block(image_init, text_image_init, num_tokens, max_length, *,
            force_pallas=False, _target_bytes_override=None):
    """JAX/Pallas equivalent of F_block.forward.

    image_init:       [B, num_tokens, D]
    text_image_init:  [B, >= num_tokens + max_length, D]
    returns:          [B, num_tokens + max_length, D]

    For the fast (aliased) Pallas path, donate text_image_init at the call
    site (jax.jit(..., donate_argnums=...)); otherwise XLA inserts a full
    defensive copy of the text tensor in front of the kernel.
    """
    B, T, D = image_init.shape
    assert T == num_tokens, "image_init must carry exactly num_tokens tokens"
    S = num_tokens + max_length
    S_total = text_image_init.shape[1]
    assert S_total >= S

    sub = _sublane(text_image_init.dtype)
    itemsize = jnp.dtype(text_image_init.dtype).itemsize
    small = B * S * D * itemsize < (1 << 20)
    lane_dense = (D % 128 == 0)

    # Hard requirements for the aliased Pallas kernel: text is exactly T+L
    # tokens (so the output can alias it), matching dtypes, sublane-aligned T.
    pallas_ok = (S_total == S
                 and image_init.dtype == text_image_init.dtype
                 and T % sub == 0)

    if pallas_ok and (force_pallas or (lane_dense and not small)):
        target = (_target_bytes_override if _target_bytes_override is not None
                  else _default_target_bytes())
        tile_b, tile_t = _pick_tiles(B, T, D, itemsize, sub, target)
        return _f_block_pallas(image_init, text_image_init, tile_b, tile_t)

    # XLA fallback: tiny problems (dispatch overhead dominates), non-lane-dense
    # D (masked vst.msk stores), or S_total > S (aliasing impossible; a wrapper
    # slice would add a full extra HBM round trip).  Fused elementwise+concat
    # reads/writes the minimum number of bytes in these cases.
    head = text_image_init[:, :num_tokens, :]
    tail = text_image_init[:, num_tokens:S, :]
    return jnp.concatenate([image_init * head + head, tail], axis=1)


if __name__ == "__main__":
    # Small, module-consistent shapes (D kept lane-dense like real BERT).
    B = 2             # batch
    NUM_TOKENS = 32   # opt.num_tokens
    MAX_LENGTH = 8    # opt.max_length
    D = 128           # hidden size (real BERT sizes are multiples of 128)

    key = jax.random.PRNGKey(0)
    k1, k2 = jax.random.split(key)
    image_init = jax.random.normal(k1, (B, NUM_TOKENS, D), dtype=jnp.float32)
    text_image_init = jax.random.normal(
        k2, (B, NUM_TOKENS + MAX_LENGTH, D), dtype=jnp.float32)

    # Reference (plain JAX), computed BEFORE any donated kernel call.
    head = text_image_init[:, :NUM_TOKENS, :]
    tail = text_image_init[:, NUM_TOKENS:NUM_TOKENS + MAX_LENGTH, :]
    ref = jax.block_until_ready(
        jnp.concatenate([image_init * head + head, tail], axis=1))

    # 1) Default tile sizing (single large block, batch-blocked), donated text.
    run = jax.jit(
        functools.partial(f_block, num_tokens=NUM_TOKENS,
                          max_length=MAX_LENGTH, force_pallas=True),
        donate_argnums=(1,),
    )
    out = jax.block_until_ready(run(image_init, jnp.copy(text_image_init)))
    assert out.shape == (B, NUM_TOKENS + MAX_LENGTH, D)
    assert out.dtype == ref.dtype
    assert jnp.allclose(out, ref, atol=1e-6), "default-tile mismatch"

    # 2) Force a multi-tile (B, T//8) grid: exercises the pipelined tiled path
    #    and verifies the aliased tail bytes survive head-only writebacks.
    run_tiled = jax.jit(
        functools.partial(f_block, num_tokens=NUM_TOKENS,
                          max_length=MAX_LENGTH, force_pallas=True,
                          _target_bytes_override=8 * D * 4),
        donate_argnums=(1,),
    )
    out2 = jax.block_until_ready(run_tiled(image_init,
                                           jnp.copy(text_image_init)))
    assert jnp.allclose(out2, ref, atol=1e-6), "multi-tile mismatch"

    # 3) Non-donated call: XLA inserts a defensive copy of the text tensor but
    #    the result must still be correct.
    out3 = jax.block_until_ready(
        f_block(image_init, text_image_init, NUM_TOKENS, MAX_LENGTH,
                force_pallas=True))
    assert jnp.allclose(out3, ref, atol=1e-6), "non-donated mismatch"

    print("KERNEL_OK")
</pallas_src>

<mosaic_0001>
module attributes {stable_mosaic.version = 11 : i64} {
  func.func @_f_block_head_kernel(%arg0: i32, %arg1: i32, %arg2: memref<2x32x128xf32, #tpu.memory_space<vmem>>, %arg3: memref<2x32x128xf32, #tpu.memory_space<vmem>>, %arg4: memref<2x32x128xf32, #tpu.memory_space<vmem>>) attributes {dimension_semantics = [#tpu.dimension_semantics<parallel>, #tpu.dimension_semantics<parallel>], iteration_bounds = array<i64: 1, 1>, scalar_prefetch = 0 : i64, scratch_operands = 0 : i64, tpu.core_type = #tpu.core_type<tc>, window_params = [{transform_indices = @transform_0, window_bounds = array<i64: 2, 32, 128>}, {transform_indices = @transform_1, window_bounds = array<i64: 2, 32, 128>}, {transform_indices = @transform_2, window_bounds = array<i64: 2, 32, 128>}]} {
    %c0 = arith.constant 0 : index
    %c0_0 = arith.constant 0 : index
    %c0_1 = arith.constant 0 : index
    %0 = vector.load %arg3[%c0, %c0_0, %c0_1] : memref<2x32x128xf32, #tpu.memory_space<vmem>>, vector<2x32x128xf32>
    %c0_2 = arith.constant 0 : index
    %c0_3 = arith.constant 0 : index
    %c0_4 = arith.constant 0 : index
    %1 = vector.load %arg2[%c0_2, %c0_3, %c0_4] : memref<2x32x128xf32, #tpu.memory_space<vmem>>, vector<2x32x128xf32>
    %2 = arith.mulf %1, %0 : vector<2x32x128xf32>
    %3 = arith.addf %2, %0 : vector<2x32x128xf32>
    %c0_5 = arith.constant 0 : index
    %c0_6 = arith.constant 0 : index
    %c0_7 = arith.constant 0 : index
    %4 = vector.load %arg4[%c0_5, %c0_6, %c0_7] : memref<2x32x128xf32, #tpu.memory_space<vmem>>, vector<2x32x128xf32>
    tpu.vector_store %arg4[%c0_5, %c0_6, %c0_7], %3 {strides = array<i32>} : memref<2x32x128xf32, #tpu.memory_space<vmem>>, vector<2x32x128xf32>,
    return
  }
  func.func @transform_0(%arg0: i32, %arg1: i32) -> (i32, i32, i32) {
    %c0_i32 = arith.constant 0 : i32
    %c0_i32_0 = arith.constant 0 : i32
    return %arg0, %arg1, %c0_i32 : i32, i32, i32
  }
  func.func @transform_1(%arg0: i32, %arg1: i32) -> (i32, i32, i32) {
    %c0_i32 = arith.constant 0 : i32
    %c0_i32_0 = arith.constant 0 : i32
    return %arg0, %arg1, %c0_i32 : i32, i32, i32
  }
  func.func @transform_2(%arg0: i32, %arg1: i32) -> (i32, i32, i32) {
    %c0_i32 = arith.constant 0 : i32
    %c0_i32_0 = arith.constant 0 : i32
    return %arg0, %arg1, %c0_i32 : i32, i32, i32
  }
}

</mosaic_0001>

<llo_original>
// kernel: f_block.1
$region0: #{f_block.1}
  #allocation0 [shape = 'u32[]', space=smem, size = 0x4, offset = 0x4, fixed_abs, tag = 'smem constant byte address 0x4 - core index']
  #allocation1 [shape = 'u32[144,128]{1,0:T(1,128)}', space=vmem, size = 0x12000, scoped, tag = 'internal scratch']
  #allocation8 [shape = 's32[]', space=sflag, size = 0x4, offset = 0, fixed_abs, tag = 'sflag constant byte address 0x0 - dummy sync flag']
  #allocation10 [shape = 's32[]', space=sflag, size = 0x4, offset = 0, fixed_abs, tag = 'sflag constant byte address 0x0 - dummy sync flag']
  %s0 = inlined_call_operand.hbm [shape: f32[2,32,128], index: 0, kind: input, shape index: {}]
  %s1 = inlined_call_operand.hbm [shape: f32[2,40,128], index: 1, kind: input, shape index: {}, may-alias: {1,2}]
  %s2 = inlined_call_operand.hbm [shape: f32[2,40,128], index: 2, kind: output, shape index: {}, may-alias: {1,2}]
  %s3 = sld [smem:[#allocation0]]
  $region26: #{f_block.1} parent=0
    _
  %s5 = ssub.s32 1, %s3
  %s6 = scalar_select 0, %s5, %s3
  $region1: #{f_block.1} parent=0
    #allocation2 [shape = 'u8[32768]{0}', space=vmem, size = 0x8000, scoped, tag = 'input window, operand 0, single buffered']
    #allocation3 [shape = 's32[1]{0}', space=sflag, size = 0x4, scoped, tag = 'scoped memory for f_block.1']
    #allocation4 [shape = 's32[1]{0}', space=sflag, size = 0x4, scoped, tag = 'scoped memory for f_block.1']
    #allocation5 [shape = 'u8[32768]{0}', space=vmem, size = 0x8000, scoped, tag = 'input window, operand 1, single buffered']
    #allocation6 [shape = 's32[1]{0}', space=sflag, size = 0x4, scoped, tag = 'scoped memory for f_block.1']
    #allocation7 [shape = 'u8[32768]{0}', space=vmem, size = 0x8000, scoped, tag = 'output window, operand 0, single buffered']
    %7 = vsyncpa [#allocation3], 0
    %8 = vsyncpa [#allocation6], 0
    %9 = vsyncpa [#allocation4], 0
    // Predicated region
    $region2: #{f_block.1} parent=1 // pred_check
      _
    $region3: #{f_block.1} parent=1 // pred_check_branch
      %11 = sbr.rel (0) target = $region5
    $region4: #{f_block.1} parent=1 // pred_region
      %s13 = ssub.s32 1024, 1024
      %14 = vsyncadd [#allocation3], %s13
      %s15 = sshll.u32 [#allocation2], 4
      %s16 = int_to_ptr.vmem [resolvable:$true] %s15
      %21 = dma.hbm_to_vmem [thread:$0]  %s0, 1024, %s16, [#allocation3], 128, 128, 8
    $region5: #{f_block.1} parent=1 // pred_fallthru
      _
    // Predicated region
    $region6: #{f_block.1} parent=1 // pred_check
      _
    $region7: #{f_block.1} parent=1 // pred_check_branch
      %23 = sbr.rel (0) target = $region9
    $region8: #{f_block.1} parent=1 // pred_region
      #allocation9 [shape = 'u32[6]{0}', space=smem, size = 0x18, scoped, tag = 'DMA stride descriptor']
      %s25 = ssub.s32 1024, 1024
      %26 = vsyncadd [#allocation6], %s25
      %s28 = sshll.u32 1, 14
      %s29 = sxor.u32 4294967295, %s28
      %s31 = sld [smem:[#allocation0]]
      %s32 = sadd.s32 2, %s31
      %s34 = sshll.u32 7, 26
      %s35 = sxor.u32 4294967295, %s34
      %s36 = sand.u32 0, %s35
      %s37 = sshll.u32 %s32, 26
      %s38 = sor.u32 %s36, %s37
      %s39 = sshll.u32 [#allocation5], 4
      %s40 = int_to_ptr.vmem [resolvable:$true] %s39
      %46 = sst [smem:[#allocation9]] 640
      %s47 = scalar_lea.smem [#allocation9], 1
      %48 = sst [smem:[%s47]] 512
      %s49 = scalar_lea.smem [#allocation9], 2
      %50 = sst [smem:[%s49]] 4
      %s51 = scalar_lea.smem [#allocation9], 3
      %52 = sst [smem:[%s51]] 128
      %s53 = scalar_lea.smem [#allocation9], 4
      %54 = sst [smem:[%s53]] 128
      %s55 = scalar_lea.smem [#allocation9], 5
      %56 = sst [smem:[%s55]] 8
      %58 = dma.general %s1, 1024, %s40, [#allocation6], [#allocation8], [#allocation9], %s38, 0
    $region9: #{f_block.1} parent=1 // pred_fallthru
      _
    // Predicated region
    $region10: #{f_block.1} parent=1 // pred_check
      _
    $region11: #{f_block.1} parent=1 // pred_check_branch
      %60 = sbr.rel (0) target = $region13
    $region12: #{f_block.1} parent=1 // pred_region
      %61 = dma.done [#allocation3], 1024
    $region13: #{f_block.1} parent=1 // pred_fallthru
      _
    // Predicated region
    $region14: #{f_block.1} parent=1 // pred_check
      _
    $region15: #{f_block.1} parent=1 // pred_check_branch
      %63 = sbr.rel (0) target = $region17
    $region16: #{f_block.1} parent=1 // pred_region
      %64 = dma.done [#allocation6], 1024
    $region17: #{f_block.1} parent=1 // pred_fallthru
      _
    %v65 = vld [vmem:[#allocation5] sm:$0xff]
    %v66 = vld [vmem:[#allocation5 + $0x8] sm:$0xff]
    %v67 = vld [vmem:[#allocation5 + $0x10] sm:$0xff]
    %v68 = vld [vmem:[#allocation5 + $0x18] sm:$0xff]
    %v69 = vld [vmem:[#allocation5 + $0x20] sm:$0xff]
    %v70 = vld [vmem:[#allocation5 + $0x28] sm:$0xff]
    %v71 = vld [vmem:[#allocation5 + $0x30] sm:$0xff]
    %v72 = vld [vmem:[#allocation5 + $0x38] sm:$0xff]
    %v73 = vld [vmem:[#allocation2] sm:$0xff]
    %v74 = vld [vmem:[#allocation2 + $0x8] sm:$0xff]
    %v75 = vld [vmem:[#allocation2 + $0x10] sm:$0xff]
    %v76 = vld [vmem:[#allocation2 + $0x18] sm:$0xff]
    %v77 = vld [vmem:[#allocation2 + $0x20] sm:$0xff]
    %v78 = vld [vmem:[#allocation2 + $0x28] sm:$0xff]
    %v79 = vld [vmem:[#allocation2 + $0x30] sm:$0xff]
    %v80 = vld [vmem:[#allocation2 + $0x38] sm:$0xff]
    %v81 = vmul.f32 %v73, %v65
    %v82 = vmul.f32 %v74, %v66
    %v83 = vmul.f32 %v75, %v67
    %v84 = vmul.f32 %v76, %v68
    %v85 = vmul.f32 %v77, %v69
    %v86 = vmul.f32 %v78, %v70
    %v87 = vmul.f32 %v79, %v71
    %v88 = vmul.f32 %v80, %v72
    %v89 = vadd.f32 %v81, %v65
    %v90 = vadd.f32 %v82, %v66
    %v91 = vadd.f32 %v83, %v67
    %v92 = vadd.f32 %v84, %v68
    %v93 = vadd.f32 %v85, %v69
    %v94 = vadd.f32 %v86, %v70
    %v95 = vadd.f32 %v87, %v71
    %v96 = vadd.f32 %v88, %v72
    %97 = vst [vmem:[#allocation7] sm:$0xff] %v89
    %98 = vst [vmem:[#allocation7 + $0x8] sm:$0xff] %v90
    %99 = vst [vmem:[#allocation7 + $0x10] sm:$0xff] %v91
    %100 = vst [vmem:[#allocation7 + $0x18] sm:$0xff] %v92
    %101 = vst [vmem:[#allocation7 + $0x20] sm:$0xff] %v93
    %102 = vst [vmem:[#allocation7 + $0x28] sm:$0xff] %v94
    %103 = vst [vmem:[#allocation7 + $0x30] sm:$0xff] %v95
    %104 = vst [vmem:[#allocation7 + $0x38] sm:$0xff] %v96
    // Predicated region
    $region18: #{f_block.1} parent=1 // pred_check
      _
    $region19: #{f_block.1} parent=1 // pred_check_branch
      %106 = sbr.rel (0) target = $region21
    $region20: #{f_block.1} parent=1 // pred_region
      #allocation11 [shape = 'u32[6]{0}', space=smem, size = 0x18, scoped, tag = 'DMA stride descriptor']
      %s108 = ssub.s32 1024, 1024
      %109 = vsyncadd [#allocation4], %s108
      %s111 = sshll.u32 1, 14
      %s112 = sxor.u32 4294967295, %s111
      %s115 = sshll.u32 7, 18
      %s116 = sxor.u32 4294967295, %s115
      %s117 = sand.u32 0, %s116
      %s119 = sor.u32 %s117, 0
      %s121 = sshll.u32 3, 24
      %s122 = sxor.u32 4294967295, %s121
      %s123 = sand.u32 %s119, %s122
      %s125 = sor.u32 %s123, 0
      %s126 = sshll.u32 [#allocation7], 4
      %s127 = int_to_ptr.vmem [resolvable:$true] %s126
      %133 = sst [smem:[#allocation11]] 512
      %s134 = scalar_lea.smem [#allocation11], 1
      %135 = sst [smem:[%s134]] 640
      %s136 = scalar_lea.smem [#allocation11], 2
      %137 = sst [smem:[%s136]] 4
      %s138 = scalar_lea.smem [#allocation11], 3
      %139 = sst [smem:[%s138]] 128
      %s140 = scalar_lea.smem [#allocation11], 4
      %141 = sst [smem:[%s140]] 128
      %s142 = scalar_lea.smem [#allocation11], 5
      %143 = sst [smem:[%s142]] 8
      %145 = dma.general %s127, 1024, %s2, [#allocation4], [#allocation10], [#allocation11], %s125, 0
    $region21: #{f_block.1} parent=1 // pred_fallthru
      _
    // Predicated region
    $region22: #{f_block.1} parent=1 // pred_check
      _
    $region23: #{f_block.1} parent=1 // pred_check_branch
      %147 = sbr.rel (0) target = $region25
    $region24: #{f_block.1} parent=1 // pred_region
      %148 = dma.done [#allocation4], 1024
    $region25: #{f_block.1} parent=1 // pred_fallthru
      _
    %149 = vsyncpa [#allocation3], 1
    %150 = vsyncpa [#allocation6], 1
    %151 = vsyncpa [#allocation4], 1

</llo_original>
